<compile_context>
chip_gen: v6e
topology: v6e:2x2x1
jax: 0.10.0
libtpu: 0.0.40
codegen_flags: <defaults>
</compile_context>

<pallas_src>
import functools

import jax
import jax.numpy as jnp
from jax import lax
from jax.experimental import pallas as pl
from jax.experimental.pallas import tpu as pltpu

LANES = 512                      # lane-dense slab width (multiple of 128 -> unmasked stores)
ROW_TILE_MAX = 1024              # 1024 x 512 x 4 B = 2 MiB per operand block
VMEM_LIMIT = 32 * 1024 * 1024    # explicit budget; safe on v5e/v6e/v7x

CG_STEPS = 10
STEP0 = 0.1
STEP_MIN = 0.0001


# ----------------------------------------------------------------------------
# slab helpers: flatten any tensor into a lane-dense [rows, 512] f32 slab
# ----------------------------------------------------------------------------
def _round_up(x, m):
    return (x + m - 1) // m * m


def _slab_geom(n):
    rows = -(-n // LANES)
    row_tile = min(ROW_TILE_MAX, _round_up(rows, 8))
    rows_padded = _round_up(rows, row_tile)
    return rows_padded, row_tile


def _to_slab(x, rows):
    flat = x.astype(jnp.float32).reshape(-1)
    pad = rows * LANES - flat.shape[0]
    if pad:
        flat = jnp.pad(flat, (0, pad))
    return flat.reshape(rows, LANES)


def _from_slab(slab, n, shape):
    return slab.reshape(-1)[:n].reshape(shape)


# ----------------------------------------------------------------------------
# Pallas kernels (gridded over row tiles)
# ----------------------------------------------------------------------------
def _residual_kernel(tar_ref, warped_ref, cot_ref, dc_ref):
    # r = tar - warped ; dc = sum(r^2) ; cotangent d(dc)/d(warped) = -2 r
    r = tar_ref[...] - warped_ref[...]
    cot_ref[...] = -2.0 * r

    @pl.when(pl.program_id(0) == 0)
    def _():
        dc_ref[...] = jnp.zeros_like(dc_ref)

    dc_ref[...] = dc_ref[...] + jnp.sum(r * r)


def _grad_kernel(disp_ref, net_ref, gdc_ref, grad_ref, reg_ref, *, two_w):
    # reg = sum((disp - net)^2) ; grad = g_dc + 2*w*(disp - net)
    diff = disp_ref[...] - net_ref[...]
    grad_ref[...] = gdc_ref[...] + two_w * diff

    @pl.when(pl.program_id(0) == 0)
    def _():
        reg_ref[...] = jnp.zeros_like(reg_ref)

    reg_ref[...] = reg_ref[...] + jnp.sum(diff * diff)


def _update_kernel(step_ref, disp_ref, g_ref, out_ref):
    # descent step with the sign flip folded in: disp - step * g
    out_ref[...] = disp_ref[...] - step_ref[0, 0] * g_ref[...]


def _tile_spec(row_tile):
    return pl.BlockSpec((row_tile, LANES), lambda i: (i, 0))


_SCALAR_OUT_SPEC = pl.BlockSpec((1, 1), lambda i: (0, 0))
_SMEM_SPEC = pl.BlockSpec(memory_space=pltpu.MemorySpace.SMEM)


def residual_pallas(tar_slab, warped_slab, row_tile):
    rows = tar_slab.shape[0]
    ngrid = rows // row_tile
    spec = _tile_spec(row_tile)
    cot, dc = pl.pallas_call(
        _residual_kernel,
        grid=(ngrid,),
        in_specs=[spec, spec],
        out_specs=(spec, _SCALAR_OUT_SPEC),
        out_shape=(
            jax.ShapeDtypeStruct((rows, LANES), jnp.float32),
            jax.ShapeDtypeStruct((1, 1), jnp.float32),
        ),
        compiler_params=pltpu.CompilerParams(
            dimension_semantics=("arbitrary",),  # scalar reduction carried across the grid
            vmem_limit_bytes=VMEM_LIMIT,
        ),
    )(tar_slab, warped_slab)
    return cot, dc[0, 0]


def grad_pallas(disp_slab, net_slab, gdc_slab, reguweight, row_tile):
    rows = disp_slab.shape[0]
    ngrid = rows // row_tile
    spec = _tile_spec(row_tile)
    kernel = functools.partial(_grad_kernel, two_w=float(2.0 * reguweight))
    grad, reg = pl.pallas_call(
        kernel,
        grid=(ngrid,),
        in_specs=[spec, spec, spec],
        out_specs=(spec, _SCALAR_OUT_SPEC),
        out_shape=(
            jax.ShapeDtypeStruct((rows, LANES), jnp.float32),
            jax.ShapeDtypeStruct((1, 1), jnp.float32),
        ),
        compiler_params=pltpu.CompilerParams(
            dimension_semantics=("arbitrary",),
            vmem_limit_bytes=VMEM_LIMIT,
        ),
    )(disp_slab, net_slab, gdc_slab)
    return grad, reg[0, 0]


def update_pallas(disp_slab, g_slab, stepsize, row_tile):
    rows = disp_slab.shape[0]
    ngrid = rows // row_tile
    spec = _tile_spec(row_tile)
    step_arr = jnp.asarray(stepsize, jnp.float32).reshape(1, 1)
    return pl.pallas_call(
        _update_kernel,
        grid=(ngrid,),
        in_specs=[_SMEM_SPEC, spec, spec],
        out_specs=spec,
        out_shape=jax.ShapeDtypeStruct((rows, LANES), jnp.float32),
        compiler_params=pltpu.CompilerParams(
            dimension_semantics=("parallel",),  # pure elementwise -> megacore-shardable
            vmem_limit_bytes=VMEM_LIMIT,
        ),
    )(step_arr, disp_slab, g_slab)


# ----------------------------------------------------------------------------
# warp_fn_3D: trilinear resampling of src at (grid + disp) voxel coordinates.
# Differentiable w.r.t. disp (through the interpolation weights), matching
# the behaviour PyTorch autograd relies on in DClayer.grad.
# ----------------------------------------------------------------------------
def warp_fn_3D(src, disp, grid, backwards_grad=True):
    # src: [B, C, D, H, W]; disp, grid: [B, 3, Dd, Hd, Wd] (voxel coords z,y,x)
    del backwards_grad  # autodiff handled by jax.vjp
    coords = grid + disp

    def sample_one(vol, crd):
        D, H, W = vol.shape
        z, y, x = crd[0], crd[1], crd[2]
        z0 = jnp.floor(z)
        y0 = jnp.floor(y)
        x0 = jnp.floor(x)
        wz, wy, wx = z - z0, y - y0, x - x0
        z0i = jnp.clip(z0.astype(jnp.int32), 0, D - 1)
        y0i = jnp.clip(y0.astype(jnp.int32), 0, H - 1)
        x0i = jnp.clip(x0.astype(jnp.int32), 0, W - 1)
        z1i = jnp.clip(z0i + 1, 0, D - 1)
        y1i = jnp.clip(y0i + 1, 0, H - 1)
        x1i = jnp.clip(x0i + 1, 0, W - 1)

        def g(zi, yi, xi):
            return vol[zi, yi, xi]

        v000 = g(z0i, y0i, x0i)
        v001 = g(z0i, y0i, x1i)
        v010 = g(z0i, y1i, x0i)
        v011 = g(z0i, y1i, x1i)
        v100 = g(z1i, y0i, x0i)
        v101 = g(z1i, y0i, x1i)
        v110 = g(z1i, y1i, x0i)
        v111 = g(z1i, y1i, x1i)
        lo = (1.0 - wy) * ((1.0 - wx) * v000 + wx * v001) + wy * ((1.0 - wx) * v010 + wx * v011)
        hi = (1.0 - wy) * ((1.0 - wx) * v100 + wx * v101) + wy * ((1.0 - wx) * v110 + wx * v111)
        return (1.0 - wz) * lo + wz * hi

    # vmap over batch and channels
    return jax.vmap(lambda s, c: jax.vmap(lambda v: sample_one(v, c))(s))(src, coords)


# ----------------------------------------------------------------------------
# DClayer forward: on-device gradient descent with halving line search
# ----------------------------------------------------------------------------
@functools.partial(jax.jit, static_argnames=("reguweight",))
def _dclayer_forward(dispini, tar, src, netoutput, grid, *, reguweight):
    disp_shape = dispini.shape
    n_disp = dispini.size
    n_tar = tar.size
    rows_d, tile_d = _slab_geom(n_disp)
    rows_t, tile_t = _slab_geom(n_tar)

    # tensors that never change are converted to slab layout exactly once
    tar_slab = _to_slab(tar, rows_t)
    net_slab = _to_slab(netoutput, rows_d)

    def grad_and_cost(disp_slab):
        # 5D view only for the warp (+ its VJP); everything else stays in slabs
        disp5 = _from_slab(disp_slab, n_disp, disp_shape)
        warped, vjp_fn = jax.vjp(
            lambda d5: warp_fn_3D(src, d5[:, :, :, 1:-1, :], grid), disp5)
        warped_slab = _to_slab(warped, rows_t)
        cot_slab, dc = residual_pallas(tar_slab, warped_slab, tile_t)        # Pallas
        cot5 = _from_slab(cot_slab, n_tar, warped.shape)
        (gdc5,) = vjp_fn(cot5)                                               # XLA gather VJP
        gdc_slab = _to_slab(gdc5, rows_d)
        grad_slab, reg = grad_pallas(disp_slab, net_slab, gdc_slab,
                                     reguweight, tile_d)                     # Pallas
        cost = dc + reguweight * reg
        return grad_slab, cost

    disp0 = _to_slab(dispini, rows_d)
    g0, cost0 = grad_and_cost(disp0)

    def cond_fn(carry):
        it, done = carry[0], carry[1]
        return jnp.logical_and(it < CG_STEPS, jnp.logical_not(done))

    def body_fn(carry):
        it, done, disp_slab, g_slab, cost, step = carry
        disp_new = update_pallas(disp_slab, g_slab, step, tile_d)            # Pallas
        g_new, cost_new = grad_and_cost(disp_new)
        accept = cost_new <= cost                                            # PyTorch: reject iff costnew > cost
        reject = jnp.logical_not(accept)
        halve = jnp.logical_and(reject, step > STEP_MIN)
        stop = jnp.logical_and(reject, jnp.logical_not(step > STEP_MIN))     # break
        step = jnp.where(halve, step * 0.5, step)
        disp_slab, g_slab, cost = lax.cond(
            accept,
            lambda: (disp_new, g_new, cost_new),
            lambda: (disp_slab, g_slab, cost),
        )
        return it + 1, stop, disp_slab, g_slab, cost, step

    carry0 = (jnp.int32(0), jnp.asarray(False), disp0, g0, cost0, jnp.float32(STEP0))
    final = lax.while_loop(cond_fn, body_fn, carry0)
    return _from_slab(final[2], n_disp, disp_shape)


class DClayerPallas:
    def __init__(self):
        self.training = False

    def forward(self, dispini, tar, src, netoutput, grid, reguweight_):
        return _dclayer_forward(dispini, tar, src, netoutput, grid,
                                reguweight=float(reguweight_))

    __call__ = forward


# ----------------------------------------------------------------------------
# main
# ----------------------------------------------------------------------------
if __name__ == "__main__":
    key = jax.random.PRNGKey(0)
    B, D, H, W = 2, 8, 16, 16  # small 3D volumes
    k1, k2, k3, k4 = jax.random.split(key, 4)

    src = jax.random.normal(k1, (B, 1, D, H, W), jnp.float32)
    tar = jax.random.normal(k2, (B, 1, D, H - 2, W), jnp.float32)
    dispini = 0.5 * jax.random.normal(k3, (B, 3, D, H, W), jnp.float32)
    netoutput = 0.5 * jax.random.normal(k4, (B, 3, D, H, W), jnp.float32)
    reguweight = 0.1

    # identity voxel-coordinate grid for the H-trimmed region (order z, y, x)
    zz, yy, xx = jnp.meshgrid(
        jnp.arange(D, dtype=jnp.float32),
        jnp.arange(1, H - 1, dtype=jnp.float32),
        jnp.arange(W, dtype=jnp.float32),
        indexing="ij",
    )
    grid = jnp.broadcast_to(jnp.stack([zz, yy, xx])[None], (B, 3, D, H - 2, W))

    layer = DClayerPallas()
    disp_out = layer.forward(dispini, tar, src, netoutput, grid, reguweight)
    disp_out = jax.block_until_ready(disp_out)
    assert disp_out.shape == dispini.shape and disp_out.dtype == jnp.float32
    assert bool(jnp.all(jnp.isfinite(disp_out)))
    print("KERNEL_OK")
</pallas_src>

<mosaic_0001>
module attributes {stable_mosaic.version = 11 : i64} {
  func.func @_residual_kernel(%arg0: i32, %arg1: memref<8x512xf32, #tpu.memory_space<vmem>>, %arg2: memref<8x512xf32, #tpu.memory_space<vmem>>, %arg3: memref<8x512xf32, #tpu.memory_space<vmem>>, %arg4: memref<1x1xf32, #tpu.memory_space<vmem>>) attributes {dimension_semantics = [#tpu.dimension_semantics<arbitrary>], iteration_bounds = array<i64: 1>, scalar_prefetch = 0 : i64, scratch_operands = 0 : i64, tpu.core_type = #tpu.core_type<tc>, window_params = [{transform_indices = @transform_0, window_bounds = array<i64: 8, 512>}, {transform_indices = @transform_1, window_bounds = array<i64: 8, 512>}, {transform_indices = @transform_2, window_bounds = array<i64: 8, 512>}, {pipeline_mode = #tpu.pipeline_mode<synchronous>, transform_indices = @transform_3, window_bounds = array<i64: 1, 1>}]} {
    %c0 = arith.constant 0 : index
    %c0_0 = arith.constant 0 : index
    %0 = vector.load %arg1[%c0, %c0_0] : memref<8x512xf32, #tpu.memory_space<vmem>>, vector<8x512xf32>
    %c0_1 = arith.constant 0 : index
    %c0_2 = arith.constant 0 : index
    %1 = vector.load %arg2[%c0_1, %c0_2] : memref<8x512xf32, #tpu.memory_space<vmem>>, vector<8x512xf32>
    %2 = arith.subf %0, %1 : vector<8x512xf32>
    %cst = arith.constant -2.000000e+00 : f32
    %3 = vector.broadcast %cst : f32 to vector<8x512xf32>
    %4 = arith.mulf %3, %2 : vector<8x512xf32>
    %c0_3 = arith.constant 0 : index
    %c0_4 = arith.constant 0 : index
    %5 = vector.load %arg3[%c0_3, %c0_4] : memref<8x512xf32, #tpu.memory_space<vmem>>, vector<8x512xf32>
    tpu.vector_store %arg3[%c0_3, %c0_4], %4 {strides = array<i32>} : memref<8x512xf32, #tpu.memory_space<vmem>>, vector<8x512xf32>,
    %c0_i32 = arith.constant 0 : i32
    %6 = arith.cmpi eq, %arg0, %c0_i32 : i32
    %7 = arith.extui %6 : i1 to i32
    %c0_i32_5 = arith.constant 0 : i32
    %8 = arith.cmpi ne, %7, %c0_i32_5 : i32
    scf.if %8 {
      %cst_11 = arith.constant 0.000000e+00 : f32
      %18 = vector.broadcast %cst_11 : f32 to vector<1x1xf32>
      %c0_12 = arith.constant 0 : index
      %c0_13 = arith.constant 0 : index
      %19 = vector.load %arg4[%c0_12, %c0_13] : memref<1x1xf32, #tpu.memory_space<vmem>>, vector<1x1xf32>
      tpu.vector_store %arg4[%c0_12, %c0_13], %18 {strides = array<i32>} : memref<1x1xf32, #tpu.memory_space<vmem>>, vector<1x1xf32>,
    } else {
    }
    %c0_6 = arith.constant 0 : index
    %c0_7 = arith.constant 0 : index
    %9 = vector.load %arg4[%c0_6, %c0_7] : memref<1x1xf32, #tpu.memory_space<vmem>>, vector<1x1xf32>
    %10 = arith.mulf %2, %2 : vector<8x512xf32>
    %11 = vector.shape_cast %10 : vector<8x512xf32> to vector<1x8x512xf32>
    %cst_8 = arith.constant dense<0.000000e+00> : vector<1xf32>
    %12 = vector.multi_reduction <add>, %11, %cst_8 [1, 2] : vector<1x8x512xf32> to vector<1xf32>
    %13 = vector.shape_cast %12 : vector<1xf32> to vector<1x1x1xf32>
    %14 = vector.extract %13[0, 0, 0] : f32 from vector<1x1x1xf32>
    %15 = vector.broadcast %14 : f32 to vector<1x1xf32>
    %16 = arith.addf %9, %15 : vector<1x1xf32>
    %c0_9 = arith.constant 0 : index
    %c0_10 = arith.constant 0 : index
    %17 = vector.load %arg4[%c0_9, %c0_10] : memref<1x1xf32, #tpu.memory_space<vmem>>, vector<1x1xf32>
    tpu.vector_store %arg4[%c0_9, %c0_10], %16 {strides = array<i32>} : memref<1x1xf32, #tpu.memory_space<vmem>>, vector<1x1xf32>,
    return
  }
  func.func @transform_0(%arg0: i32) -> (i32, i32) {
    %c0_i32 = arith.constant 0 : i32
    %c0_i32_0 = arith.constant 0 : i32
    return %arg0, %c0_i32 : i32, i32
  }
  func.func @transform_1(%arg0: i32) -> (i32, i32) {
    %c0_i32 = arith.constant 0 : i32
    %c0_i32_0 = arith.constant 0 : i32
    return %arg0, %c0_i32 : i32, i32
  }
  func.func @transform_2(%arg0: i32) -> (i32, i32) {
    %c0_i32 = arith.constant 0 : i32
    %c0_i32_0 = arith.constant 0 : i32
    return %arg0, %c0_i32 : i32, i32
  }
  func.func @transform_3(%arg0: i32) -> (i32, i32) {
    %c0_i32 = arith.constant 0 : i32
    %c0_i32_0 = arith.constant 0 : i32
    %c0_i32_1 = arith.constant 0 : i32
    return %c0_i32, %c0_i32_0 : i32, i32
  }
}

module attributes {stable_mosaic.version = 11 : i64} {
  func.func @_grad_kernel(%arg0: i32, %arg1: memref<24x512xf32, #tpu.memory_space<vmem>>, %arg2: memref<24x512xf32, #tpu.memory_space<vmem>>, %arg3: memref<24x512xf32, #tpu.memory_space<vmem>>, %arg4: memref<24x512xf32, #tpu.memory_space<vmem>>, %arg5: memref<1x1xf32, #tpu.memory_space<vmem>>) attributes {dimension_semantics = [#tpu.dimension_semantics<arbitrary>], iteration_bounds = array<i64: 1>, scalar_prefetch = 0 : i64, scratch_operands = 0 : i64, tpu.core_type = #tpu.core_type<tc>, window_params = [{transform_indices = @transform_0, window_bounds = array<i64: 24, 512>}, {transform_indices = @transform_1, window_bounds = array<i64: 24, 512>}, {transform_indices = @transform_2, window_bounds = array<i64: 24, 512>}, {transform_indices = @transform_3, window_bounds = array<i64: 24, 512>}, {pipeline_mode = #tpu.pipeline_mode<synchronous>, transform_indices = @transform_4, window_bounds = array<i64: 1, 1>}]} {
    %c0 = arith.constant 0 : index
    %c0_0 = arith.constant 0 : index
    %0 = vector.load %arg1[%c0, %c0_0] : memref<24x512xf32, #tpu.memory_space<vmem>>, vector<24x512xf32>
    %c0_1 = arith.constant 0 : index
    %c0_2 = arith.constant 0 : index
    %1 = vector.load %arg2[%c0_1, %c0_2] : memref<24x512xf32, #tpu.memory_space<vmem>>, vector<24x512xf32>
    %2 = arith.subf %0, %1 : vector<24x512xf32>
    %c0_3 = arith.constant 0 : index
    %c0_4 = arith.constant 0 : index
    %3 = vector.load %arg3[%c0_3, %c0_4] : memref<24x512xf32, #tpu.memory_space<vmem>>, vector<24x512xf32>
    %cst = arith.constant 2.000000e-01 : f32
    %4 = vector.broadcast %cst : f32 to vector<24x512xf32>
    %5 = arith.mulf %4, %2 : vector<24x512xf32>
    %6 = arith.addf %3, %5 : vector<24x512xf32>
    %c0_5 = arith.constant 0 : index
    %c0_6 = arith.constant 0 : index
    %7 = vector.load %arg4[%c0_5, %c0_6] : memref<24x512xf32, #tpu.memory_space<vmem>>, vector<24x512xf32>
    tpu.vector_store %arg4[%c0_5, %c0_6], %6 {strides = array<i32>} : memref<24x512xf32, #tpu.memory_space<vmem>>, vector<24x512xf32>,
    %c0_i32 = arith.constant 0 : i32
    %8 = arith.cmpi eq, %arg0, %c0_i32 : i32
    %9 = arith.extui %8 : i1 to i32
    %c0_i32_7 = arith.constant 0 : i32
    %10 = arith.cmpi ne, %9, %c0_i32_7 : i32
    scf.if %10 {
      %cst_13 = arith.constant 0.000000e+00 : f32
      %20 = vector.broadcast %cst_13 : f32 to vector<1x1xf32>
      %c0_14 = arith.constant 0 : index
      %c0_15 = arith.constant 0 : index
      %21 = vector.load %arg5[%c0_14, %c0_15] : memref<1x1xf32, #tpu.memory_space<vmem>>, vector<1x1xf32>
      tpu.vector_store %arg5[%c0_14, %c0_15], %20 {strides = array<i32>} : memref<1x1xf32, #tpu.memory_space<vmem>>, vector<1x1xf32>,
    } else {
    }
    %c0_8 = arith.constant 0 : index
    %c0_9 = arith.constant 0 : index
    %11 = vector.load %arg5[%c0_8, %c0_9] : memref<1x1xf32, #tpu.memory_space<vmem>>, vector<1x1xf32>
    %12 = arith.mulf %2, %2 : vector<24x512xf32>
    %13 = vector.shape_cast %12 : vector<24x512xf32> to vector<1x24x512xf32>
    %cst_10 = arith.constant dense<0.000000e+00> : vector<1xf32>
    %14 = vector.multi_reduction <add>, %13, %cst_10 [1, 2] : vector<1x24x512xf32> to vector<1xf32>
    %15 = vector.shape_cast %14 : vector<1xf32> to vector<1x1x1xf32>
    %16 = vector.extract %15[0, 0, 0] : f32 from vector<1x1x1xf32>
    %17 = vector.broadcast %16 : f32 to vector<1x1xf32>
    %18 = arith.addf %11, %17 : vector<1x1xf32>
    %c0_11 = arith.constant 0 : index
    %c0_12 = arith.constant 0 : index
    %19 = vector.load %arg5[%c0_11, %c0_12] : memref<1x1xf32, #tpu.memory_space<vmem>>, vector<1x1xf32>
    tpu.vector_store %arg5[%c0_11, %c0_12], %18 {strides = array<i32>} : memref<1x1xf32, #tpu.memory_space<vmem>>, vector<1x1xf32>,
    return
  }
  func.func @transform_0(%arg0: i32) -> (i32, i32) {
    %c0_i32 = arith.constant 0 : i32
    %c0_i32_0 = arith.constant 0 : i32
    return %arg0, %c0_i32 : i32, i32
  }
  func.func @transform_1(%arg0: i32) -> (i32, i32) {
    %c0_i32 = arith.constant 0 : i32
    %c0_i32_0 = arith.constant 0 : i32
    return %arg0, %c0_i32 : i32, i32
  }
  func.func @transform_2(%arg0: i32) -> (i32, i32) {
    %c0_i32 = arith.constant 0 : i32
    %c0_i32_0 = arith.constant 0 : i32
    return %arg0, %c0_i32 : i32, i32
  }
  func.func @transform_3(%arg0: i32) -> (i32, i32) {
    %c0_i32 = arith.constant 0 : i32
    %c0_i32_0 = arith.constant 0 : i32
    return %arg0, %c0_i32 : i32, i32
  }
  func.func @transform_4(%arg0: i32) -> (i32, i32) {
    %c0_i32 = arith.constant 0 : i32
    %c0_i32_0 = arith.constant 0 : i32
    %c0_i32_1 = arith.constant 0 : i32
    return %c0_i32, %c0_i32_0 : i32, i32
  }
}

module attributes {stable_mosaic.version = 11 : i64} {
  func.func @_update_kernel(%arg0: i32, %arg1: memref<1x1xf32, #tpu.memory_space<smem>>, %arg2: memref<24x512xf32, #tpu.memory_space<vmem>>, %arg3: memref<24x512xf32, #tpu.memory_space<vmem>>, %arg4: memref<24x512xf32, #tpu.memory_space<vmem>>) attributes {dimension_semantics = [#tpu.dimension_semantics<parallel>], iteration_bounds = array<i64: 1>, scalar_prefetch = 0 : i64, scratch_operands = 0 : i64, tpu.core_type = #tpu.core_type<tc>, window_params = [{transform_indices = @transform_0, window_bounds = array<i64: 1, 1>}, {transform_indices = @transform_1, window_bounds = array<i64: 24, 512>}, {transform_indices = @transform_2, window_bounds = array<i64: 24, 512>}, {transform_indices = @transform_3, window_bounds = array<i64: 24, 512>}]} {
    %c0 = arith.constant 0 : index
    %c0_0 = arith.constant 0 : index
    %0 = vector.load %arg2[%c0, %c0_0] : memref<24x512xf32, #tpu.memory_space<vmem>>, vector<24x512xf32>
    %c0_1 = arith.constant 0 : index
    %c0_2 = arith.constant 0 : index
    %1 = memref.load %arg1[%c0_1, %c0_2] : memref<1x1xf32, #tpu.memory_space<smem>>
    %c0_3 = arith.constant 0 : index
    %c0_4 = arith.constant 0 : index
    %2 = vector.load %arg3[%c0_3, %c0_4] : memref<24x512xf32, #tpu.memory_space<vmem>>, vector<24x512xf32>
    %3 = vector.broadcast %1 : f32 to vector<24x512xf32>
    %4 = arith.mulf %3, %2 : vector<24x512xf32>
    %5 = arith.subf %0, %4 : vector<24x512xf32>
    %c0_5 = arith.constant 0 : index
    %c0_6 = arith.constant 0 : index
    %6 = vector.load %arg4[%c0_5, %c0_6] : memref<24x512xf32, #tpu.memory_space<vmem>>, vector<24x512xf32>
    tpu.vector_store %arg4[%c0_5, %c0_6], %5 {strides = array<i32>} : memref<24x512xf32, #tpu.memory_space<vmem>>, vector<24x512xf32>,
    return
  }
  func.func @transform_0(%arg0: i32) -> (i32, i32) {
    %c0_i32 = arith.constant 0 : i32
    %c0_i32_0 = arith.constant 0 : i32
    %c0_i32_1 = arith.constant 0 : i32
    return %c0_i32, %c0_i32_0 : i32, i32
  }
  func.func @transform_1(%arg0: i32) -> (i32, i32) {
    %c0_i32 = arith.constant 0 : i32
    %c0_i32_0 = arith.constant 0 : i32
    return %arg0, %c0_i32 : i32, i32
  }
  func.func @transform_2(%arg0: i32) -> (i32, i32) {
    %c0_i32 = arith.constant 0 : i32
    %c0_i32_0 = arith.constant 0 : i32
    return %arg0, %c0_i32 : i32, i32
  }
  func.func @transform_3(%arg0: i32) -> (i32, i32) {
    %c0_i32 = arith.constant 0 : i32
    %c0_i32_0 = arith.constant 0 : i32
    return %arg0, %c0_i32 : i32, i32
  }
}

module attributes {stable_mosaic.version = 11 : i64} {
  func.func @_grad_kernel(%arg0: i32, %arg1: memref<24x512xf32, #tpu.memory_space<vmem>>, %arg2: memref<24x512xf32, #tpu.memory_space<vmem>>, %arg3: memref<24x512xf32, #tpu.memory_space<vmem>>, %arg4: memref<24x512xf32, #tpu.memory_space<vmem>>, %arg5: memref<1x1xf32, #tpu.memory_space<vmem>>) attributes {dimension_semantics = [#tpu.dimension_semantics<arbitrary>], iteration_bounds = array<i64: 1>, scalar_prefetch = 0 : i64, scratch_operands = 0 : i64, tpu.core_type = #tpu.core_type<tc>, window_params = [{transform_indices = @transform_0, window_bounds = array<i64: 24, 512>}, {transform_indices = @transform_1, window_bounds = array<i64: 24, 512>}, {transform_indices = @transform_2, window_bounds = array<i64: 24, 512>}, {transform_indices = @transform_3, window_bounds = array<i64: 24, 512>}, {pipeline_mode = #tpu.pipeline_mode<synchronous>, transform_indices = @transform_4, window_bounds = array<i64: 1, 1>}]} {
    %c0 = arith.constant 0 : index
    %c0_0 = arith.constant 0 : index
    %0 = vector.load %arg1[%c0, %c0_0] : memref<24x512xf32, #tpu.memory_space<vmem>>, vector<24x512xf32>
    %c0_1 = arith.constant 0 : index
    %c0_2 = arith.constant 0 : index
    %1 = vector.load %arg2[%c0_1, %c0_2] : memref<24x512xf32, #tpu.memory_space<vmem>>, vector<24x512xf32>
    %2 = arith.subf %0, %1 : vector<24x512xf32>
    %c0_3 = arith.constant 0 : index
    %c0_4 = arith.constant 0 : index
    %3 = vector.load %arg3[%c0_3, %c0_4] : memref<24x512xf32, #tpu.memory_space<vmem>>, vector<24x512xf32>
    %cst = arith.constant 2.000000e-01 : f32
    %4 = vector.broadcast %cst : f32 to vector<24x512xf32>
    %5 = arith.mulf %4, %2 : vector<24x512xf32>
    %6 = arith.addf %3, %5 : vector<24x512xf32>
    %c0_5 = arith.constant 0 : index
    %c0_6 = arith.constant 0 : index
    %7 = vector.load %arg4[%c0_5, %c0_6] : memref<24x512xf32, #tpu.memory_space<vmem>>, vector<24x512xf32>
    tpu.vector_store %arg4[%c0_5, %c0_6], %6 {strides = array<i32>} : memref<24x512xf32, #tpu.memory_space<vmem>>, vector<24x512xf32>,
    %c0_i32 = arith.constant 0 : i32
    %8 = arith.cmpi eq, %arg0, %c0_i32 : i32
    %9 = arith.extui %8 : i1 to i32
    %c0_i32_7 = arith.constant 0 : i32
    %10 = arith.cmpi ne, %9, %c0_i32_7 : i32
    scf.if %10 {
      %cst_13 = arith.constant 0.000000e+00 : f32
      %20 = vector.broadcast %cst_13 : f32 to vector<1x1xf32>
      %c0_14 = arith.constant 0 : index
      %c0_15 = arith.constant 0 : index
      %21 = vector.load %arg5[%c0_14, %c0_15] : memref<1x1xf32, #tpu.memory_space<vmem>>, vector<1x1xf32>
      tpu.vector_store %arg5[%c0_14, %c0_15], %20 {strides = array<i32>} : memref<1x1xf32, #tpu.memory_space<vmem>>, vector<1x1xf32>,
    } else {
    }
    %c0_8 = arith.constant 0 : index
    %c0_9 = arith.constant 0 : index
    %11 = vector.load %arg5[%c0_8, %c0_9] : memref<1x1xf32, #tpu.memory_space<vmem>>, vector<1x1xf32>
    %12 = arith.mulf %2, %2 : vector<24x512xf32>
    %13 = vector.shape_cast %12 : vector<24x512xf32> to vector<1x24x512xf32>
    %cst_10 = arith.constant dense<0.000000e+00> : vector<1xf32>
    %14 = vector.multi_reduction <add>, %13, %cst_10 [1, 2] : vector<1x24x512xf32> to vector<1xf32>
    %15 = vector.shape_cast %14 : vector<1xf32> to vector<1x1x1xf32>
    %16 = vector.extract %15[0, 0, 0] : f32 from vector<1x1x1xf32>
    %17 = vector.broadcast %16 : f32 to vector<1x1xf32>
    %18 = arith.addf %11, %17 : vector<1x1xf32>
    %c0_11 = arith.constant 0 : index
    %c0_12 = arith.constant 0 : index
    %19 = vector.load %arg5[%c0_11, %c0_12] : memref<1x1xf32, #tpu.memory_space<vmem>>, vector<1x1xf32>
    tpu.vector_store %arg5[%c0_11, %c0_12], %18 {strides = array<i32>} : memref<1x1xf32, #tpu.memory_space<vmem>>, vector<1x1xf32>,
    return
  }
  func.func @transform_0(%arg0: i32) -> (i32, i32) {
    %c0_i32 = arith.constant 0 : i32
    %c0_i32_0 = arith.constant 0 : i32
    return %arg0, %c0_i32 : i32, i32
  }
  func.func @transform_1(%arg0: i32) -> (i32, i32) {
    %c0_i32 = arith.constant 0 : i32
    %c0_i32_0 = arith.constant 0 : i32
    return %arg0, %c0_i32 : i32, i32
  }
  func.func @transform_2(%arg0: i32) -> (i32, i32) {
    %c0_i32 = arith.constant 0 : i32
    %c0_i32_0 = arith.constant 0 : i32
    return %arg0, %c0_i32 : i32, i32
  }
  func.func @transform_3(%arg0: i32) -> (i32, i32) {
    %c0_i32 = arith.constant 0 : i32
    %c0_i32_0 = arith.constant 0 : i32
    return %arg0, %c0_i32 : i32, i32
  }
  func.func @transform_4(%arg0: i32) -> (i32, i32) {
    %c0_i32 = arith.constant 0 : i32
    %c0_i32_0 = arith.constant 0 : i32
    %c0_i32_1 = arith.constant 0 : i32
    return %c0_i32, %c0_i32_0 : i32, i32
  }
}

</mosaic_0001>

<llo_original>
// kernel: _dclayer_forward.2
$region0: #{_dclayer_forward.2}
  #allocation0 [shape = 'u32[]', space=smem, size = 0x4, offset = 0x4, fixed_abs, tag = 'smem constant byte address 0x4 - core index']
  #allocation1 [shape = 'u32[144,128]{1,0:T(1,128)}', space=vmem, size = 0x12000, scoped, tag = 'internal scratch']
  %s0 = inlined_call_operand.vmem [shape: f32[8,512], index: 0, kind: input, shape index: {}]
  %s1 = inlined_call_operand.vmem [shape: f32[8,512], index: 1, kind: input, shape index: {}]
  %s2 = inlined_call_operand.vmem [shape: f32[8,512], index: 2, kind: output, shape index: {0}]
  %s3 = inlined_call_operand.hbm [shape: f32[1,1], index: 3, kind: output, shape index: {1}]
  %4 = xla_tuple %s2, %s3
  %s5 = sld [smem:[#allocation0]]
  $region30: #{_dclayer_forward.2} parent=0
    _
  %s7 = ssub.s32 1, %s5
  %s8 = scalar_select 0, %s7, %s5
  $region1: #{_dclayer_forward.2} parent=0
    #allocation2 [shape = 'u8[512]{0}', space=vmem, size = 0x400, scoped, tag = 'output window, operand 1, single buffered']
    #allocation3 [shape = 's32[1]{0}', space=sflag, size = 0x4, scoped, tag = 'scoped memory for _dclayer_forward.2']
    %9 = vsyncpa [#allocation3], 0
    // Predicated region
    $region2: #{_dclayer_forward.2} parent=1 // pred_check
      _
    $region3: #{_dclayer_forward.2} parent=1 // pred_check_branch
      %11 = sbr.rel (0) target = $region5
    $region4: #{_dclayer_forward.2} parent=1 // pred_region
      _
    $region5: #{_dclayer_forward.2} parent=1 // pred_fallthru
      _
    // Predicated region
    $region6: #{_dclayer_forward.2} parent=1 // pred_check
      _
    $region7: #{_dclayer_forward.2} parent=1 // pred_check_branch
      %13 = sbr.rel (0) target = $region9
    $region8: #{_dclayer_forward.2} parent=1 // pred_region
      _
    $region9: #{_dclayer_forward.2} parent=1 // pred_fallthru
      _
    %v14 = vld [vmem:[%s0] sm:$0xff]
    %v15 = vld [vmem:[%s0 + $0x8] sm:$0xff]
    %v16 = vld [vmem:[%s0 + $0x10] sm:$0xff]
    %v17 = vld [vmem:[%s0 + $0x18] sm:$0xff]
    %v18 = vld [vmem:[%s1] sm:$0xff]
    %v19 = vld [vmem:[%s1 + $0x8] sm:$0xff]
    %v20 = vld [vmem:[%s1 + $0x10] sm:$0xff]
    %v21 = vld [vmem:[%s1 + $0x18] sm:$0xff]
    %v22 = vsub.f32 %v14, %v18
    %v23 = vsub.f32 %v15, %v19
    %v24 = vsub.f32 %v16, %v20
    %v25 = vsub.f32 %v17, %v21
    %v26 = vmul.f32 %v22, -2.0
    %v27 = vmul.f32 %v23, -2.0
    %v28 = vmul.f32 %v24, -2.0
    %v29 = vmul.f32 %v25, -2.0
    %30 = vst [vmem:[%s2] sm:$0xff] %v26
    %31 = vst [vmem:[%s2 + $0x8] sm:$0xff] %v27
    %32 = vst [vmem:[%s2 + $0x10] sm:$0xff] %v28
    %33 = vst [vmem:[%s2 + $0x18] sm:$0xff] %v29
    %p34 = scmp.eq.s32.totalorder 0, 0
    // Predicated region
    $region10: #{_dclayer_forward.2} parent=1 // pred_check
      %p35 = pneg %p34
    $region11: #{_dclayer_forward.2} parent=1 // pred_check_branch
      %37 = sbr.rel (%p35) target = $region13
    $region12: #{_dclayer_forward.2} parent=1 // pred_region
      %vm38 = vcmask 0
      %39 = vst.msk [vmem:[#allocation2] sm:$0x1] %vm38, 0.0
    $region13: #{_dclayer_forward.2} parent=1 // pred_fallthru
      _
    %v40 = vld [vmem:[#allocation2] sm:$0x1]
    %v41 = vmul.f32 %v22, %v22
    %v42 = vmul.f32 %v23, %v23
    %v43 = vmul.f32 %v24, %v24
    %v44 = vmul.f32 %v25, %v25
    %v45 = vadd.f32 %v41, %v42
    %v46 = vadd.f32 %v45, %v43
    %v47 = vadd.f32 %v46, %v44
    %48 = vadd.xlane.f32.xlu0 %v47
    %v49 = vpop.xlane.xlu0 %48
    %v50 = vrot.slane %v49, 4
    %v51 = vadd.f32 %v49, %v50
    %v52 = vrot.slane %v51, 2
    %v53 = vadd.f32 %v51, %v52
    %v54 = vrot.slane %v53, 1
    %v55 = vadd.f32 %v53, %v54
    %s56 = vtos %v55
    %v57 = vstv %s56
    %v58 = vadd.f32 %v40, %v57
    %vm59 = vcmask 0
    %60 = vst.msk [vmem:[#allocation2] sm:$0x1] %vm59, %v58
    // Predicated region
    $region14: #{_dclayer_forward.2} parent=1 // pred_check
      _
    $region15: #{_dclayer_forward.2} parent=1 // pred_check_branch
      %62 = sbr.rel (0) target = $region17
    $region16: #{_dclayer_forward.2} parent=1 // pred_region
      _
    $region17: #{_dclayer_forward.2} parent=1 // pred_fallthru
      _
    // Predicated region
    $region18: #{_dclayer_forward.2} parent=1 // pred_check
      _
    $region19: #{_dclayer_forward.2} parent=1 // pred_check_branch
      %64 = sbr.rel (0) target = $region21
    $region20: #{_dclayer_forward.2} parent=1 // pred_region
      %s66 = ssub.s32 16, 16
      %67 = vsyncadd [#allocation3], %s66
      %s69 = sshll.u32 [#allocation2], 4
      %s70 = int_to_ptr.vmem [resolvable:$true] %s69
      %72 = dma.vmem_to_hbm [thread:$0]  %s70, 16, %s3, [#allocation3]
    $region21: #{_dclayer_forward.2} parent=1 // pred_fallthru
      _
    // Predicated region
    $region22: #{_dclayer_forward.2} parent=1 // pred_check
      _
    $region23: #{_dclayer_forward.2} parent=1 // pred_check_branch
      %74 = sbr.rel (0) target = $region25
    $region24: #{_dclayer_forward.2} parent=1 // pred_region
      _
    $region25: #{_dclayer_forward.2} parent=1 // pred_fallthru
      _
    // Predicated region
    $region26: #{_dclayer_forward.2} parent=1 // pred_check
      _
    $region27: #{_dclayer_forward.2} parent=1 // pred_check_branch
      %76 = sbr.rel (0) target = $region29
    $region28: #{_dclayer_forward.2} parent=1 // pred_region
      %77 = dma.done [#allocation3], 16
    $region29: #{_dclayer_forward.2} parent=1 // pred_fallthru
      _
    %78 = vsyncpa [#allocation3], 1

// kernel: _dclayer_forward.3
$region0: #{_dclayer_forward.3}
  #allocation0 [shape = 'u32[]', space=smem, size = 0x4, offset = 0x4, fixed_abs, tag = 'smem constant byte address 0x4 - core index']
  #allocation1 [shape = 'u32[144,128]{1,0:T(1,128)}', space=vmem, size = 0x12000, scoped, tag = 'internal scratch']
  %s0 = inlined_call_operand.hbm [shape: f32[24,512], index: 0, kind: input, shape index: {}]
  %s1 = inlined_call_operand.vmem [shape: f32[24,512], index: 1, kind: input, shape index: {}]
  %s2 = inlined_call_operand.vmem [shape: f32[24,512], index: 2, kind: input, shape index: {}]
  %s3 = inlined_call_operand.hbm [shape: f32[24,512], index: 3, kind: output, shape index: {0}]
  %s4 = inlined_call_operand.hbm [shape: f32[1,1], index: 4, kind: output, shape index: {1}]
  %5 = xla_tuple %s3, %s4
  %s6 = sld [smem:[#allocation0]]
  $region38: #{_dclayer_forward.3} parent=0
    _
  %s8 = ssub.s32 1, %s6
  %s9 = scalar_select 0, %s8, %s6
  $region1: #{_dclayer_forward.3} parent=0
    #allocation2 [shape = 'u8[49152]{0}', space=vmem, size = 0xc000, scoped, tag = 'input window, operand 0, single buffered']
    #allocation3 [shape = 's32[1]{0}', space=sflag, size = 0x4, scoped, tag = 'scoped memory for _dclayer_forward.3']
    #allocation4 [shape = 's32[1]{0}', space=sflag, size = 0x4, scoped, tag = 'scoped memory for _dclayer_forward.3']
    #allocation5 [shape = 'u8[49152]{0}', space=vmem, size = 0xc000, scoped, tag = 'output window, operand 0, single buffered']
    #allocation6 [shape = 'u8[512]{0}', space=vmem, size = 0x400, scoped, tag = 'output window, operand 1, single buffered']
    #allocation7 [shape = 's32[1]{0}', space=sflag, size = 0x4, scoped, tag = 'scoped memory for _dclayer_forward.3']
    %10 = vsyncpa [#allocation3], 0
    %11 = vsyncpa [#allocation4], 0
    %12 = vsyncpa [#allocation7], 0
    // Predicated region
    $region2: #{_dclayer_forward.3} parent=1 // pred_check
      _
    $region3: #{_dclayer_forward.3} parent=1 // pred_check_branch
      %14 = sbr.rel (0) target = $region5
    $region4: #{_dclayer_forward.3} parent=1 // pred_region
      %s16 = ssub.s32 1536, 1536
      %17 = vsyncadd [#allocation3], %s16
      %s18 = sshll.u32 [#allocation2], 4
      %s19 = int_to_ptr.vmem [resolvable:$true] %s18
      %24 = dma.hbm_to_vmem [thread:$0]  %s0, 1536, %s19, [#allocation3], 512, 512, 32
    $region5: #{_dclayer_forward.3} parent=1 // pred_fallthru
      _
    // Predicated region
    $region6: #{_dclayer_forward.3} parent=1 // pred_check
      _
    $region7: #{_dclayer_forward.3} parent=1 // pred_check_branch
      %26 = sbr.rel (0) target = $region9
    $region8: #{_dclayer_forward.3} parent=1 // pred_region
      _
    $region9: #{_dclayer_forward.3} parent=1 // pred_fallthru
      _
    // Predicated region
    $region10: #{_dclayer_forward.3} parent=1 // pred_check
      _
    $region11: #{_dclayer_forward.3} parent=1 // pred_check_branch
      %28 = sbr.rel (0) target = $region13
    $region12: #{_dclayer_forward.3} parent=1 // pred_region
      _
    $region13: #{_dclayer_forward.3} parent=1 // pred_fallthru
      _
    // Predicated region
    $region14: #{_dclayer_forward.3} parent=1 // pred_check
      _
    $region15: #{_dclayer_forward.3} parent=1 // pred_check_branch
      %30 = sbr.rel (0) target = $region17
    $region16: #{_dclayer_forward.3} parent=1 // pred_region
      %31 = dma.done [#allocation3], 1536
    $region17: #{_dclayer_forward.3} parent=1 // pred_fallthru
      _
    %v32 = vld [vmem:[#allocation2] sm:$0xff]
    %v33 = vld [vmem:[#allocation2 + $0x8] sm:$0xff]
    %v34 = vld [vmem:[#allocation2 + $0x10] sm:$0xff]
    %v35 = vld [vmem:[#allocation2 + $0x18] sm:$0xff]
    %v36 = vld [vmem:[#allocation2 + $0x20] sm:$0xff]
    %v37 = vld [vmem:[#allocation2 + $0x28] sm:$0xff]
    %v38 = vld [vmem:[#allocation2 + $0x30] sm:$0xff]
    %v39 = vld [vmem:[#allocation2 + $0x38] sm:$0xff]
    %v40 = vld [vmem:[#allocation2 + $0x40] sm:$0xff]
    %v41 = vld [vmem:[#allocation2 + $0x48] sm:$0xff]
    %v42 = vld [vmem:[#allocation2 + $0x50] sm:$0xff]
    %v43 = vld [vmem:[#allocation2 + $0x58] sm:$0xff]
    %v44 = vld [vmem:[%s1] sm:$0xff]
    %v45 = vld [vmem:[%s1 + $0x8] sm:$0xff]
    %v46 = vld [vmem:[%s1 + $0x10] sm:$0xff]
    %v47 = vld [vmem:[%s1 + $0x18] sm:$0xff]
    %v48 = vld [vmem:[%s1 + $0x20] sm:$0xff]
    %v49 = vld [vmem:[%s1 + $0x28] sm:$0xff]
    %v50 = vld [vmem:[%s1 + $0x30] sm:$0xff]
    %v51 = vld [vmem:[%s1 + $0x38] sm:$0xff]
    %v52 = vld [vmem:[%s1 + $0x40] sm:$0xff]
    %v53 = vld [vmem:[%s1 + $0x48] sm:$0xff]
    %v54 = vld [vmem:[%s1 + $0x50] sm:$0xff]
    %v55 = vld [vmem:[%s1 + $0x58] sm:$0xff]
    %v56 = vsub.f32 %v32, %v44
    %v57 = vsub.f32 %v33, %v45
    %v58 = vsub.f32 %v34, %v46
    %v59 = vsub.f32 %v35, %v47
    %v60 = vsub.f32 %v36, %v48
    %v61 = vsub.f32 %v37, %v49
    %v62 = vsub.f32 %v38, %v50
    %v63 = vsub.f32 %v39, %v51
    %v64 = vsub.f32 %v40, %v52
    %v65 = vsub.f32 %v41, %v53
    %v66 = vsub.f32 %v42, %v54
    %v67 = vsub.f32 %v43, %v55
    %v68 = vld [vmem:[%s2] sm:$0xff]
    %v69 = vld [vmem:[%s2 + $0x8] sm:$0xff]
    %v70 = vld [vmem:[%s2 + $0x10] sm:$0xff]
    %v71 = vld [vmem:[%s2 + $0x18] sm:$0xff]
    %v72 = vld [vmem:[%s2 + $0x20] sm:$0xff]
    %v73 = vld [vmem:[%s2 + $0x28] sm:$0xff]
    %v74 = vld [vmem:[%s2 + $0x30] sm:$0xff]
    %v75 = vld [vmem:[%s2 + $0x38] sm:$0xff]
    %v76 = vld [vmem:[%s2 + $0x40] sm:$0xff]
    %v77 = vld [vmem:[%s2 + $0x48] sm:$0xff]
    %v78 = vld [vmem:[%s2 + $0x50] sm:$0xff]
    %v79 = vld [vmem:[%s2 + $0x58] sm:$0xff]
    %v80 = vmul.f32 %v56, 0.2
    %v81 = vmul.f32 %v57, 0.2
    %v82 = vmul.f32 %v58, 0.2
    %v83 = vmul.f32 %v59, 0.2
    %v84 = vmul.f32 %v60, 0.2
    %v85 = vmul.f32 %v61, 0.2
    %v86 = vmul.f32 %v62, 0.2
    %v87 = vmul.f32 %v63, 0.2
    %v88 = vmul.f32 %v64, 0.2
    %v89 = vmul.f32 %v65, 0.2
    %v90 = vmul.f32 %v66, 0.2
    %v91 = vmul.f32 %v67, 0.2
    %v92 = vadd.f32 %v68, %v80
    %v93 = vadd.f32 %v69, %v81
    %v94 = vadd.f32 %v70, %v82
    %v95 = vadd.f32 %v71, %v83
    %v96 = vadd.f32 %v72, %v84
    %v97 = vadd.f32 %v73, %v85
    %v98 = vadd.f32 %v74, %v86
    %v99 = vadd.f32 %v75, %v87
    %v100 = vadd.f32 %v76, %v88
    %v101 = vadd.f32 %v77, %v89
    %v102 = vadd.f32 %v78, %v90
    %v103 = vadd.f32 %v79, %v91
    %104 = vst [vmem:[#allocation5] sm:$0xff] %v92
    %105 = vst [vmem:[#allocation5 + $0x8] sm:$0xff] %v93
    %106 = vst [vmem:[#allocation5 + $0x10] sm:$0xff] %v94
    %107 = vst [vmem:[#allocation5 + $0x18] sm:$0xff] %v95
    %108 = vst [vmem:[#allocation5 + $0x20] sm:$0xff] %v96
    %109 = vst [vmem:[#allocation5 + $0x28] sm:$0xff] %v97
    %110 = vst [vmem:[#allocation5 + $0x30] sm:$0xff] %v98
    %111 = vst [vmem:[#allocation5 + $0x38] sm:$0xff] %v99
    %112 = vst [vmem:[#allocation5 + $0x40] sm:$0xff] %v100
    %113 = vst [vmem:[#allocation5 + $0x48] sm:$0xff] %v101
    %114 = vst [vmem:[#allocation5 + $0x50] sm:$0xff] %v102
    %115 = vst [vmem:[#allocation5 + $0x58] sm:$0xff] %v103
    %p116 = scmp.eq.s32.totalorder 0, 0
    // Predicated region
    $region18: #{_dclayer_forward.3} parent=1 // pred_check
      %p117 = pneg %p116
    $region19: #{_dclayer_forward.3} parent=1 // pred_check_branch
      %119 = sbr.rel (%p117) target = $region21
    $region20: #{_dclayer_forward.3} parent=1 // pred_region
      %vm120 = vcmask 0
      %121 = vst.msk [vmem:[#allocation6] sm:$0x1] %vm120, 0.0
    $region21: #{_dclayer_forward.3} parent=1 // pred_fallthru
      _
    %v122 = vld [vmem:[#allocation6] sm:$0x1]
    %v123 = vmul.f32 %v56, %v56
    %v124 = vmul.f32 %v57, %v57
    %v125 = vmul.f32 %v58, %v58
    %v126 = vmul.f32 %v59, %v59
    %v127 = vmul.f32 %v60, %v60
    %v128 = vmul.f32 %v61, %v61
    %v129 = vmul.f32 %v62, %v62
    %v130 = vmul.f32 %v63, %v63
    %v131 = vmul.f32 %v64, %v64
    %v132 = vmul.f32 %v65, %v65
    %v133 = vmul.f32 %v66, %v66
    %v134 = vmul.f32 %v67, %v67
    %v135 = vadd.f32 %v123, %v124
    %v136 = vadd.f32 %v135, %v125
    %v137 = vadd.f32 %v136, %v126
    %v138 = vadd.f32 %v137, %v127
    %v139 = vadd.f32 %v138, %v128
    %v140 = vadd.f32 %v139, %v129
    %v141 = vadd.f32 %v140, %v130
    %v142 = vadd.f32 %v141, %v131
    %v143 = vadd.f32 %v142, %v132
    %v144 = vadd.f32 %v143, %v133
    %v145 = vadd.f32 %v144, %v134
    %146 = vadd.xlane.f32.xlu0 %v145
    %v147 = vpop.xlane.xlu0 %146
    %v148 = vrot.slane %v147, 4
    %v149 = vadd.f32 %v147, %v148
    %v150 = vrot.slane %v149, 2
    %v151 = vadd.f32 %v149, %v150
    %v152 = vrot.slane %v151, 1
    %v153 = vadd.f32 %v151, %v152
    %s154 = vtos %v153
    %v155 = vstv %s154
    %v156 = vadd.f32 %v122, %v155
    %vm157 = vcmask 0
    %158 = vst.msk [vmem:[#allocation6] sm:$0x1] %vm157, %v156
    // Predicated region
    $region22: #{_dclayer_forward.3} parent=1 // pred_check
      _
    $region23: #{_dclayer_forward.3} parent=1 // pred_check_branch
      %160 = sbr.rel (0) target = $region25
    $region24: #{_dclayer_forward.3} parent=1 // pred_region
      %s162 = ssub.s32 1536, 1536
      %163 = vsyncadd [#allocation4], %s162
      %s164 = sshll.u32 [#allocation5], 4
      %s165 = int_to_ptr.vmem [resolvable:$true] %s164
      %170 = dma.vmem_to_hbm [thread:$0]  %s165, 1536, %s3, [#allocation4], 512, 512, 32
    $region25: #{_dclayer_forward.3} parent=1 // pred_fallthru
      _
    // Predicated region
    $region26: #{_dclayer_forward.3} parent=1 // pred_check
      _
    $region27: #{_dclayer_forward.3} parent=1 // pred_check_branch
      %172 = sbr.rel (0) target = $region29
    $region28: #{_dclayer_forward.3} parent=1 // pred_region
      %s174 = ssub.s32 16, 16
      %175 = vsyncadd [#allocation7], %s174
      %s177 = sshll.u32 [#allocation6], 4
      %s178 = int_to_ptr.vmem [resolvable:$true] %s177
      %180 = dma.vmem_to_hbm [thread:$0]  %s178, 16, %s4, [#allocation7]
    $region29: #{_dclayer_forward.3} parent=1 // pred_fallthru
      _
    // Predicated region
    $region30: #{_dclayer_forward.3} parent=1 // pred_check
      _
    $region31: #{_dclayer_forward.3} parent=1 // pred_check_branch
      %182 = sbr.rel (0) target = $region33
    $region32: #{_dclayer_forward.3} parent=1 // pred_region
      %183 = dma.done [#allocation4], 1536
    $region33: #{_dclayer_forward.3} parent=1 // pred_fallthru
      _
    // Predicated region
    $region34: #{_dclayer_forward.3} parent=1 // pred_check
      _
    $region35: #{_dclayer_forward.3} parent=1 // pred_check_branch
      %185 = sbr.rel (0) target = $region37
    $region36: #{_dclayer_forward.3} parent=1 // pred_region
      %186 = dma.done [#allocation7], 16
    $region37: #{_dclayer_forward.3} parent=1 // pred_fallthru
      _
    %187 = vsyncpa [#allocation3], 1
    %188 = vsyncpa [#allocation4], 1
    %189 = vsyncpa [#allocation7], 1

// kernel: body.18
$region0: #{body.18}
  #allocation0 [shape = 'u32[]', space=smem, size = 0x4, offset = 0x4, fixed_abs, tag = 'smem constant byte address 0x4 - core index']
  #allocation1 [shape = 'u32[144,128]{1,0:T(1,128)}', space=vmem, size = 0x12000, scoped, tag = 'internal scratch']
  #allocation2 [shape = 'f32[1,1]{1,0:T(1,128)S(6)}', space=smem, size = 0x200, scoped, tag = 'scoped memory for body.18']
  %s0 = inlined_call_operand.<no memory space> [shape: f32[1,1], index: 0, kind: input, shape index: {}]
  %s1 = inlined_call_operand.hbm [shape: f32[24,512], index: 1, kind: input, shape index: {}]
  %s2 = inlined_call_operand.hbm [shape: f32[24,512], index: 2, kind: input, shape index: {}]
  %s3 = inlined_call_operand.vmem [shape: f32[24,512], index: 3, kind: output, shape index: {}]
  %s4 = sld [smem:[#allocation0]]
  $region30: #{body.18} parent=0
    _
  %s6 = ssub.s32 1, %s4
  %s7 = scalar_select 0, %s6, %s4
  %8 = sst [smem:[#allocation2]] %s0
  $region1: #{body.18} parent=0
    #allocation3 [shape = 'u8[49152]{0}', space=vmem, size = 0xc000, scoped, tag = 'input window, operand 1, single buffered']
    #allocation4 [shape = 's32[1]{0}', space=sflag, size = 0x4, scoped, tag = 'scoped memory for body.18']
    #allocation5 [shape = 'u8[49152]{0}', space=vmem, size = 0xc000, scoped, tag = 'input window, operand 2, single buffered']
    #allocation6 [shape = 's32[1]{0}', space=sflag, size = 0x4, scoped, tag = 'scoped memory for body.18']
    %9 = vsyncpa [#allocation4], 0
    %10 = vsyncpa [#allocation6], 0
    // Predicated region
    $region2: #{body.18} parent=1 // pred_check
      _
    $region3: #{body.18} parent=1 // pred_check_branch
      %12 = sbr.rel (0) target = $region5
    $region4: #{body.18} parent=1 // pred_region
      _
    $region5: #{body.18} parent=1 // pred_fallthru
      _
    // Predicated region
    $region6: #{body.18} parent=1 // pred_check
      _
    $region7: #{body.18} parent=1 // pred_check_branch
      %14 = sbr.rel (0) target = $region9
    $region8: #{body.18} parent=1 // pred_region
      %s16 = ssub.s32 1536, 1536
      %17 = vsyncadd [#allocation4], %s16
      %s18 = sshll.u32 [#allocation3], 4
      %s19 = int_to_ptr.vmem [resolvable:$true] %s18
      %24 = dma.hbm_to_vmem [thread:$0]  %s1, 1536, %s19, [#allocation4], 512, 512, 32
    $region9: #{body.18} parent=1 // pred_fallthru
      _
    // Predicated region
    $region10: #{body.18} parent=1 // pred_check
      _
    $region11: #{body.18} parent=1 // pred_check_branch
      %26 = sbr.rel (0) target = $region13
    $region12: #{body.18} parent=1 // pred_region
      %s28 = ssub.s32 1536, 1536
      %29 = vsyncadd [#allocation6], %s28
      %s30 = sshll.u32 [#allocation5], 4
      %s31 = int_to_ptr.vmem [resolvable:$true] %s30
      %36 = dma.hbm_to_vmem [thread:$0]  %s2, 1536, %s31, [#allocation6], 512, 512, 32
    $region13: #{body.18} parent=1 // pred_fallthru
      _
    // Predicated region
    $region14: #{body.18} parent=1 // pred_check
      _
    $region15: #{body.18} parent=1 // pred_check_branch
      %38 = sbr.rel (0) target = $region17
    $region16: #{body.18} parent=1 // pred_region
      %39 = dma.done [#allocation4], 1536
    $region17: #{body.18} parent=1 // pred_fallthru
      _
    // Predicated region
    $region18: #{body.18} parent=1 // pred_check
      _
    $region19: #{body.18} parent=1 // pred_check_branch
      %41 = sbr.rel (0) target = $region21
    $region20: #{body.18} parent=1 // pred_region
      %42 = dma.done [#allocation6], 1536
    $region21: #{body.18} parent=1 // pred_fallthru
      _
    %v43 = vld [vmem:[#allocation3] sm:$0xff]
    %v44 = vld [vmem:[#allocation3 + $0x8] sm:$0xff]
    %v45 = vld [vmem:[#allocation3 + $0x10] sm:$0xff]
    %v46 = vld [vmem:[#allocation3 + $0x18] sm:$0xff]
    %v47 = vld [vmem:[#allocation3 + $0x20] sm:$0xff]
    %v48 = vld [vmem:[#allocation3 + $0x28] sm:$0xff]
    %v49 = vld [vmem:[#allocation3 + $0x30] sm:$0xff]
    %v50 = vld [vmem:[#allocation3 + $0x38] sm:$0xff]
    %v51 = vld [vmem:[#allocation3 + $0x40] sm:$0xff]
    %v52 = vld [vmem:[#allocation3 + $0x48] sm:$0xff]
    %v53 = vld [vmem:[#allocation3 + $0x50] sm:$0xff]
    %v54 = vld [vmem:[#allocation3 + $0x58] sm:$0xff]
    %s55 = sld [smem:[#allocation2]]
    %v56 = vld [vmem:[#allocation5] sm:$0xff]
    %v57 = vld [vmem:[#allocation5 + $0x8] sm:$0xff]
    %v58 = vld [vmem:[#allocation5 + $0x10] sm:$0xff]
    %v59 = vld [vmem:[#allocation5 + $0x18] sm:$0xff]
    %v60 = vld [vmem:[#allocation5 + $0x20] sm:$0xff]
    %v61 = vld [vmem:[#allocation5 + $0x28] sm:$0xff]
    %v62 = vld [vmem:[#allocation5 + $0x30] sm:$0xff]
    %v63 = vld [vmem:[#allocation5 + $0x38] sm:$0xff]
    %v64 = vld [vmem:[#allocation5 + $0x40] sm:$0xff]
    %v65 = vld [vmem:[#allocation5 + $0x48] sm:$0xff]
    %v66 = vld [vmem:[#allocation5 + $0x50] sm:$0xff]
    %v67 = vld [vmem:[#allocation5 + $0x58] sm:$0xff]
    %v68 = vstv %s55
    %v69 = vmul.f32 %v68, %v56
    %v70 = vmul.f32 %v68, %v57
    %v71 = vmul.f32 %v68, %v58
    %v72 = vmul.f32 %v68, %v59
    %v73 = vmul.f32 %v68, %v60
    %v74 = vmul.f32 %v68, %v61
    %v75 = vmul.f32 %v68, %v62
    %v76 = vmul.f32 %v68, %v63
    %v77 = vmul.f32 %v68, %v64
    %v78 = vmul.f32 %v68, %v65
    %v79 = vmul.f32 %v68, %v66
    %v80 = vmul.f32 %v68, %v67
    %v81 = vsub.f32 %v43, %v69
    %v82 = vsub.f32 %v44, %v70
    %v83 = vsub.f32 %v45, %v71
    %v84 = vsub.f32 %v46, %v72
    %v85 = vsub.f32 %v47, %v73
    %v86 = vsub.f32 %v48, %v74
    %v87 = vsub.f32 %v49, %v75
    %v88 = vsub.f32 %v50, %v76
    %v89 = vsub.f32 %v51, %v77
    %v90 = vsub.f32 %v52, %v78
    %v91 = vsub.f32 %v53, %v79
    %v92 = vsub.f32 %v54, %v80
    %93 = vst [vmem:[%s3] sm:$0xff] %v81
    %94 = vst [vmem:[%s3 + $0x8] sm:$0xff] %v82
    %95 = vst [vmem:[%s3 + $0x10] sm:$0xff] %v83
    %96 = vst [vmem:[%s3 + $0x18] sm:$0xff] %v84
    %97 = vst [vmem:[%s3 + $0x20] sm:$0xff] %v85
    %98 = vst [vmem:[%s3 + $0x28] sm:$0xff] %v86
    %99 = vst [vmem:[%s3 + $0x30] sm:$0xff] %v87
    %100 = vst [vmem:[%s3 + $0x38] sm:$0xff] %v88
    %101 = vst [vmem:[%s3 + $0x40] sm:$0xff] %v89
    %102 = vst [vmem:[%s3 + $0x48] sm:$0xff] %v90
    %103 = vst [vmem:[%s3 + $0x50] sm:$0xff] %v91
    %104 = vst [vmem:[%s3 + $0x58] sm:$0xff] %v92
    // Predicated region
    $region22: #{body.18} parent=1 // pred_check
      _
    $region23: #{body.18} parent=1 // pred_check_branch
      %106 = sbr.rel (0) target = $region25
    $region24: #{body.18} parent=1 // pred_region
      _
    $region25: #{body.18} parent=1 // pred_fallthru
      _
    // Predicated region
    $region26: #{body.18} parent=1 // pred_check
      _
    $region27: #{body.18} parent=1 // pred_check_branch
      %108 = sbr.rel (0) target = $region29
    $region28: #{body.18} parent=1 // pred_region
      _
    $region29: #{body.18} parent=1 // pred_fallthru
      _
    %109 = vsyncpa [#allocation4], 1
    %110 = vsyncpa [#allocation6], 1

// kernel: body.20
$region0: #{body.20}
  #allocation0 [shape = 'u32[]', space=smem, size = 0x4, offset = 0x4, fixed_abs, tag = 'smem constant byte address 0x4 - core index']
  #allocation1 [shape = 'u32[144,128]{1,0:T(1,128)}', space=vmem, size = 0x12000, scoped, tag = 'internal scratch']
  %s0 = inlined_call_operand.vmem [shape: f32[24,512], index: 0, kind: input, shape index: {}]
  %s1 = inlined_call_operand.vmem [shape: f32[24,512], index: 1, kind: input, shape index: {}]
  %s2 = inlined_call_operand.vmem [shape: f32[24,512], index: 2, kind: input, shape index: {}]
  %s3 = inlined_call_operand.vmem [shape: f32[24,512], index: 3, kind: output, shape index: {0}]
  %s4 = inlined_call_operand.hbm [shape: f32[1,1], index: 4, kind: output, shape index: {1}]
  %5 = xla_tuple %s3, %s4
  %s6 = sld [smem:[#allocation0]]
  $region34: #{body.20} parent=0
    _
  %s8 = ssub.s32 1, %s6
  %s9 = scalar_select 0, %s8, %s6
  $region1: #{body.20} parent=0
    #allocation2 [shape = 'u8[512]{0}', space=vmem, size = 0x400, scoped, tag = 'output window, operand 1, single buffered']
    #allocation3 [shape = 's32[1]{0}', space=sflag, size = 0x4, scoped, tag = 'scoped memory for body.20']
    %10 = vsyncpa [#allocation3], 0
    // Predicated region
    $region2: #{body.20} parent=1 // pred_check
      _
    $region3: #{body.20} parent=1 // pred_check_branch
      %12 = sbr.rel (0) target = $region5
    $region4: #{body.20} parent=1 // pred_region
      _
    $region5: #{body.20} parent=1 // pred_fallthru
      _
    // Predicated region
    $region6: #{body.20} parent=1 // pred_check
      _
    $region7: #{body.20} parent=1 // pred_check_branch
      %14 = sbr.rel (0) target = $region9
    $region8: #{body.20} parent=1 // pred_region
      _
    $region9: #{body.20} parent=1 // pred_fallthru
      _
    // Predicated region
    $region10: #{body.20} parent=1 // pred_check
      _
    $region11: #{body.20} parent=1 // pred_check_branch
      %16 = sbr.rel (0) target = $region13
    $region12: #{body.20} parent=1 // pred_region
      _
    $region13: #{body.20} parent=1 // pred_fallthru
      _
    %v17 = vld [vmem:[%s0] sm:$0xff]
    %v18 = vld [vmem:[%s0 + $0x8] sm:$0xff]
    %v19 = vld [vmem:[%s0 + $0x10] sm:$0xff]
    %v20 = vld [vmem:[%s0 + $0x18] sm:$0xff]
    %v21 = vld [vmem:[%s0 + $0x20] sm:$0xff]
    %v22 = vld [vmem:[%s0 + $0x28] sm:$0xff]
    %v23 = vld [vmem:[%s0 + $0x30] sm:$0xff]
    %v24 = vld [vmem:[%s0 + $0x38] sm:$0xff]
    %v25 = vld [vmem:[%s0 + $0x40] sm:$0xff]
    %v26 = vld [vmem:[%s0 + $0x48] sm:$0xff]
    %v27 = vld [vmem:[%s0 + $0x50] sm:$0xff]
    %v28 = vld [vmem:[%s0 + $0x58] sm:$0xff]
    %v29 = vld [vmem:[%s1] sm:$0xff]
    %v30 = vld [vmem:[%s1 + $0x8] sm:$0xff]
    %v31 = vld [vmem:[%s1 + $0x10] sm:$0xff]
    %v32 = vld [vmem:[%s1 + $0x18] sm:$0xff]
    %v33 = vld [vmem:[%s1 + $0x20] sm:$0xff]
    %v34 = vld [vmem:[%s1 + $0x28] sm:$0xff]
    %v35 = vld [vmem:[%s1 + $0x30] sm:$0xff]
    %v36 = vld [vmem:[%s1 + $0x38] sm:$0xff]
    %v37 = vld [vmem:[%s1 + $0x40] sm:$0xff]
    %v38 = vld [vmem:[%s1 + $0x48] sm:$0xff]
    %v39 = vld [vmem:[%s1 + $0x50] sm:$0xff]
    %v40 = vld [vmem:[%s1 + $0x58] sm:$0xff]
    %v41 = vsub.f32 %v17, %v29
    %v42 = vsub.f32 %v18, %v30
    %v43 = vsub.f32 %v19, %v31
    %v44 = vsub.f32 %v20, %v32
    %v45 = vsub.f32 %v21, %v33
    %v46 = vsub.f32 %v22, %v34
    %v47 = vsub.f32 %v23, %v35
    %v48 = vsub.f32 %v24, %v36
    %v49 = vsub.f32 %v25, %v37
    %v50 = vsub.f32 %v26, %v38
    %v51 = vsub.f32 %v27, %v39
    %v52 = vsub.f32 %v28, %v40
    %v53 = vld [vmem:[%s2] sm:$0xff]
    %v54 = vld [vmem:[%s2 + $0x8] sm:$0xff]
    %v55 = vld [vmem:[%s2 + $0x10] sm:$0xff]
    %v56 = vld [vmem:[%s2 + $0x18] sm:$0xff]
    %v57 = vld [vmem:[%s2 + $0x20] sm:$0xff]
    %v58 = vld [vmem:[%s2 + $0x28] sm:$0xff]
    %v59 = vld [vmem:[%s2 + $0x30] sm:$0xff]
    %v60 = vld [vmem:[%s2 + $0x38] sm:$0xff]
    %v61 = vld [vmem:[%s2 + $0x40] sm:$0xff]
    %v62 = vld [vmem:[%s2 + $0x48] sm:$0xff]
    %v63 = vld [vmem:[%s2 + $0x50] sm:$0xff]
    %v64 = vld [vmem:[%s2 + $0x58] sm:$0xff]
    %v65 = vmul.f32 %v41, 0.2
    %v66 = vmul.f32 %v42, 0.2
    %v67 = vmul.f32 %v43, 0.2
    %v68 = vmul.f32 %v44, 0.2
    %v69 = vmul.f32 %v45, 0.2
    %v70 = vmul.f32 %v46, 0.2
    %v71 = vmul.f32 %v47, 0.2
    %v72 = vmul.f32 %v48, 0.2
    %v73 = vmul.f32 %v49, 0.2
    %v74 = vmul.f32 %v50, 0.2
    %v75 = vmul.f32 %v51, 0.2
    %v76 = vmul.f32 %v52, 0.2
    %v77 = vadd.f32 %v53, %v65
    %v78 = vadd.f32 %v54, %v66
    %v79 = vadd.f32 %v55, %v67
    %v80 = vadd.f32 %v56, %v68
    %v81 = vadd.f32 %v57, %v69
    %v82 = vadd.f32 %v58, %v70
    %v83 = vadd.f32 %v59, %v71
    %v84 = vadd.f32 %v60, %v72
    %v85 = vadd.f32 %v61, %v73
    %v86 = vadd.f32 %v62, %v74
    %v87 = vadd.f32 %v63, %v75
    %v88 = vadd.f32 %v64, %v76
    %89 = vst [vmem:[%s3] sm:$0xff] %v77
    %90 = vst [vmem:[%s3 + $0x8] sm:$0xff] %v78
    %91 = vst [vmem:[%s3 + $0x10] sm:$0xff] %v79
    %92 = vst [vmem:[%s3 + $0x18] sm:$0xff] %v80
    %93 = vst [vmem:[%s3 + $0x20] sm:$0xff] %v81
    %94 = vst [vmem:[%s3 + $0x28] sm:$0xff] %v82
    %95 = vst [vmem:[%s3 + $0x30] sm:$0xff] %v83
    %96 = vst [vmem:[%s3 + $0x38] sm:$0xff] %v84
    %97 = vst [vmem:[%s3 + $0x40] sm:$0xff] %v85
    %98 = vst [vmem:[%s3 + $0x48] sm:$0xff] %v86
    %99 = vst [vmem:[%s3 + $0x50] sm:$0xff] %v87
    %100 = vst [vmem:[%s3 + $0x58] sm:$0xff] %v88
    %p101 = scmp.eq.s32.totalorder 0, 0
    // Predicated region
    $region14: #{body.20} parent=1 // pred_check
      %p102 = pneg %p101
    $region15: #{body.20} parent=1 // pred_check_branch
      %104 = sbr.rel (%p102) target = $region17
    $region16: #{body.20} parent=1 // pred_region
      %vm105 = vcmask 0
      %106 = vst.msk [vmem:[#allocation2] sm:$0x1] %vm105, 0.0
    $region17: #{body.20} parent=1 // pred_fallthru
      _
    %v107 = vld [vmem:[#allocation2] sm:$0x1]
    %v108 = vmul.f32 %v41, %v41
    %v109 = vmul.f32 %v42, %v42
    %v110 = vmul.f32 %v43, %v43
    %v111 = vmul.f32 %v44, %v44
    %v112 = vmul.f32 %v45, %v45
    %v113 = vmul.f32 %v46, %v46
    %v114 = vmul.f32 %v47, %v47
    %v115 = vmul.f32 %v48, %v48
    %v116 = vmul.f32 %v49, %v49
    %v117 = vmul.f32 %v50, %v50
    %v118 = vmul.f32 %v51, %v51
    %v119 = vmul.f32 %v52, %v52
    %v120 = vadd.f32 %v108, %v109
    %v121 = vadd.f32 %v120, %v110
    %v122 = vadd.f32 %v121, %v111
    %v123 = vadd.f32 %v122, %v112
    %v124 = vadd.f32 %v123, %v113
    %v125 = vadd.f32 %v124, %v114
    %v126 = vadd.f32 %v125, %v115
    %v127 = vadd.f32 %v126, %v116
    %v128 = vadd.f32 %v127, %v117
    %v129 = vadd.f32 %v128, %v118
    %v130 = vadd.f32 %v129, %v119
    %131 = vadd.xlane.f32.xlu0 %v130
    %v132 = vpop.xlane.xlu0 %131
    %v133 = vrot.slane %v132, 4
    %v134 = vadd.f32 %v132, %v133
    %v135 = vrot.slane %v134, 2
    %v136 = vadd.f32 %v134, %v135
    %v137 = vrot.slane %v136, 1
    %v138 = vadd.f32 %v136, %v137
    %s139 = vtos %v138
    %v140 = vstv %s139
    %v141 = vadd.f32 %v107, %v140
    %vm142 = vcmask 0
    %143 = vst.msk [vmem:[#allocation2] sm:$0x1] %vm142, %v141
    // Predicated region
    $region18: #{body.20} parent=1 // pred_check
      _
    $region19: #{body.20} parent=1 // pred_check_branch
      %145 = sbr.rel (0) target = $region21
    $region20: #{body.20} parent=1 // pred_region
      _
    $region21: #{body.20} parent=1 // pred_fallthru
      _
    // Predicated region
    $region22: #{body.20} parent=1 // pred_check
      _
    $region23: #{body.20} parent=1 // pred_check_branch
      %147 = sbr.rel (0) target = $region25
    $region24: #{body.20} parent=1 // pred_region
      %s149 = ssub.s32 16, 16
      %150 = vsyncadd [#allocation3], %s149
      %s152 = sshll.u32 [#allocation2], 4
      %s153 = int_to_ptr.vmem [resolvable:$true] %s152
      %155 = dma.vmem_to_hbm [thread:$0]  %s153, 16, %s4, [#allocation3]
    $region25: #{body.20} parent=1 // pred_fallthru
      _
    // Predicated region
    $region26: #{body.20} parent=1 // pred_check
      _
    $region27: #{body.20} parent=1 // pred_check_branch
      %157 = sbr.rel (0) target = $region29
    $region28: #{body.20} parent=1 // pred_region
      _
    $region29: #{body.20} parent=1 // pred_fallthru
      _
    // Predicated region
    $region30: #{body.20} parent=1 // pred_check
      _
    $region31: #{body.20} parent=1 // pred_check_branch
      %159 = sbr.rel (0) target = $region33
    $region32: #{body.20} parent=1 // pred_region
      %160 = dma.done [#allocation3], 16
    $region33: #{body.20} parent=1 // pred_fallthru
      _
    %161 = vsyncpa [#allocation3], 1

</llo_original>
